<compile_context>
chip_gen: v7x
topology: tpu7x:2x2x1
jax: 0.10.0
libtpu: 0.0.40
codegen_flags: <defaults>
</compile_context>

<pallas_src>
from typing import NamedTuple

import jax
import jax.numpy as jnp
from jax.experimental import pallas as pl
from jax.experimental.pallas import tpu as pltpu

EPS = 1e-5


# ----------------------------------------------------------------------------
# One-time (per weight / entity-table update) preparation — hoisted out of the
# per-decode-call path on purpose (review item: cast/pad/transpose reuse).
# ----------------------------------------------------------------------------
class PreppedWeights(NamedTuple):
    m0: jax.Array      # (C, D, D)    bf16  banded conv matrix, input chan 0
    m1: jax.Array      # (C, D, D)    bf16  banded conv matrix, input chan 1
    fcw: jax.Array     # (C, D, Dout) bf16  fc weight, channel-major split
    bn0_g: jax.Array   # (2,)  f32
    bn0_b: jax.Array   # (2,)  f32
    bn1_g: jax.Array   # (C,)  f32
    bn1_b: jax.Array   # (C,)  f32
    bn2_g2: jax.Array  # (1, Dout) f32
    bn2_b2: jax.Array  # (1, Dout) f32


class PreppedEntities(NamedTuple):
    obT: jax.Array     # (D, n_pad) bf16, K-major, zero-padded columns
    n_valid: int
    tile_n: int


def _round_up(n, m):
    return ((n + m - 1) // m) * m


def _conv_band_matrices(conv_w, D):
    """(C, 2, 3) Conv1d kernel -> two (C, D, D) banded matrices.

    m_i[c, r, d] = conv_w[c, i, k] with r = d + k - 1 (zero elsewhere), so
    conv_out[b, c, d] = x0[b, :] @ m0[c] + x1[b, :] @ m1[c] reproduces
    Conv1d(2, C, 3, padding=1).
    """
    r = jnp.arange(D)
    d = jnp.arange(D)
    offs = jnp.arange(3) - 1  # tap k reads input position d + (k - 1)
    basis = (r[None, :, None] == (d[None, None, :] + offs[:, None, None])
             ).astype(jnp.float32)                       # (3, D, D) [k, r, d]
    M = jnp.einsum('oik,krd->iord', conv_w.astype(jnp.float32), basis)
    return M[0], M[1]                                    # each (C, D, D)


def prepare_weights(conv_w, conv_b, fc_w, fc_b,
                    bn0_g, bn0_b, bn1_g, bn1_b, bn2_g, bn2_b):
    C = conv_w.shape[0]
    Dout, CD = fc_w.shape
    D = CD // C
    m0, m1 = _conv_band_matrices(conv_w, D)
    fcw = fc_w.astype(jnp.float32).T.reshape(C, D, Dout)  # rows are c*D + d
    # conv_b / fc_b are exact no-ops: each is a constant added immediately
    # before a training-mode BatchNorm that subtracts the batch mean.
    del conv_b, fc_b
    return PreppedWeights(
        m0=m0.astype(jnp.bfloat16), m1=m1.astype(jnp.bfloat16),
        fcw=fcw.astype(jnp.bfloat16),
        bn0_g=jnp.asarray(bn0_g, jnp.float32),
        bn0_b=jnp.asarray(bn0_b, jnp.float32),
        bn1_g=jnp.asarray(bn1_g, jnp.float32),
        bn1_b=jnp.asarray(bn1_b, jnp.float32),
        bn2_g2=jnp.asarray(bn2_g, jnp.float32).reshape(1, Dout),
        bn2_b2=jnp.asarray(bn2_b, jnp.float32).reshape(1, Dout))


def prepare_entities(ob, *, entity_tile=1024, max_batch=1024,
                     vmem_budget_bytes=44 << 20):
    """bf16 cast + K-major transpose + pad, done once per entity-table update."""
    assert entity_tile % 128 == 0, "entity tile must be lane-dense (x128)"
    N, D = ob.shape
    tile_n = min(entity_tile, _round_up(N, 128))
    # v7x check: the (B, tile_n) f32 output tile is double-buffered; keep the
    # scoring working set under ~44 MiB so it fits v7x's 64 MiB physical VMEM.
    def est(t):
        return 2 * (max_batch * t * 4 + t * D * 2) + max_batch * D * 2
    while tile_n % 256 == 0 and est(tile_n) > vmem_budget_bytes:
        tile_n //= 2
    num_tiles = pl.cdiv(N, tile_n)
    if num_tiles > 1 and num_tiles % 2 == 1:
        num_tiles += 1            # even tile count -> even 2-TC split on v7x
    n_pad = num_tiles * tile_n
    obT = jnp.pad(ob.astype(jnp.bfloat16).T, ((0, 0), (0, n_pad - N)))
    return PreppedEntities(obT=obT, n_valid=N, tile_n=tile_n)


# ----------------------------------------------------------------------------
# Kernel 1: activation  (tanh -> bn0 -> [conv -> bn1/relu -> fc]_fused -> bn2/relu)
# ----------------------------------------------------------------------------
def _activation_kernel(sub_ref, rel_ref, bn0_g_ref, bn0_b_ref,
                       bn1_g_ref, bn1_b_ref, m0_ref, m1_ref, fcw_ref,
                       bn2_g_ref, bn2_b_ref, x_out_ref, acc_ref):
    C = m0_ref.shape[0]

    def bn_slab(x, g, b):
        # Training-mode BatchNorm over a whole slab; two-pass variance
        # (avoids E[x^2]-E[x]^2 catastrophic cancellation).
        mu = jnp.mean(x)
        xc = x - mu
        var = jnp.mean(xc * xc)
        return xc * jax.lax.rsqrt(var + EPS) * g + b

    # bn0 (BatchNorm1d(2): per-input-channel stats over (B, D)); input
    # dropout p=0 -> identity.  Cast once to bf16 so conv matmuls run at full
    # MXU bf16 rate.
    x0 = bn_slab(jnp.tanh(sub_ref[...]),
                 bn0_g_ref[0], bn0_b_ref[0]).astype(jnp.bfloat16)
    x1 = bn_slab(rel_ref[...], bn0_g_ref[1], bn0_b_ref[1]).astype(jnp.bfloat16)

    acc_ref[...] = jnp.zeros_like(acc_ref)

    # Fused per-output-channel pipeline.  Each channel is a full, lane-aligned
    # (B, D) slab: no (B, C*D) scratch, no misaligned c*D offsets, bn1 stats
    # from the f32 conv output, bf16 only on the value fed to the fc MXU.
    @pl.loop(0, C)
    def _(c):
        conv = (jnp.dot(x0, m0_ref[c], preferred_element_type=jnp.float32) +
                jnp.dot(x1, m1_ref[c], preferred_element_type=jnp.float32))
        mu = jnp.mean(conv)
        cc = conv - mu
        var = jnp.mean(cc * cc)
        h = cc * jax.lax.rsqrt(var + EPS) * bn1_g_ref[c] + bn1_b_ref[c]
        h = jnp.maximum(h, 0.0).astype(jnp.bfloat16)   # feature-map dropout p=0
        acc_ref[...] += jnp.dot(h, fcw_ref[c],
                                preferred_element_type=jnp.float32)

    # hidden dropout p=0 -> identity.  bn2 (per-feature over batch) + relu.
    x = acc_ref[...]
    mu2 = jnp.mean(x, axis=0, keepdims=True)
    xc2 = x - mu2
    var2 = jnp.mean(xc2 * xc2, axis=0, keepdims=True)
    x = xc2 * jax.lax.rsqrt(var2 + EPS) * bn2_g_ref[...] + bn2_b_ref[...]
    x_out_ref[...] = jnp.maximum(x, 0.0).astype(x_out_ref.dtype)


def _activation(sub, rel, w: PreppedWeights):
    B, D = sub.shape
    Dout = w.fcw.shape[-1]

    # Explicit scoped-VMEM budget (v5e default 16 MiB is too small at real
    # sizes); conservative x2 on streams for double-buffering.
    est = ((w.m0.size + w.m1.size + w.fcw.size) * 2 * 2
           + 2 * (sub.size * 4 + rel.size * 4 + B * Dout * 2)
           + B * Dout * 4 + 4 * Dout * 4 + (2 << 20))
    vmem_limit = max(32 << 20, int(est * 1.25))
    # TODO(synk): at very large B on v7x (64 MiB physical VMEM) this single-
    # shot kernel needs a batch-tiled variant with two-pass BN statistics.

    def vmem(shape):
        return pl.BlockSpec(shape, lambda i, _n=len(shape): (0,) * _n)

    smem = pl.BlockSpec(memory_space=pltpu.MemorySpace.SMEM)

    return pl.pallas_call(
        _activation_kernel,
        out_shape=jax.ShapeDtypeStruct((B, Dout), jnp.bfloat16),
        grid=(1,),
        in_specs=[vmem((B, D)), vmem((B, D)),
                  smem, smem, smem, smem,
                  vmem(w.m0.shape), vmem(w.m1.shape), vmem(w.fcw.shape),
                  vmem(w.bn2_g2.shape), vmem(w.bn2_b2.shape)],
        out_specs=vmem((B, Dout)),
        scratch_shapes=[pltpu.VMEM((B, Dout), jnp.float32)],
        compiler_params=pltpu.CompilerParams(
            dimension_semantics=("arbitrary",),
            vmem_limit_bytes=vmem_limit),
    )(sub, rel, w.bn0_g, w.bn0_b, w.bn1_g, w.bn1_b,
      w.m0, w.m1, w.fcw, w.bn2_g2, w.bn2_b2)


# ----------------------------------------------------------------------------
# Kernel 2: scoring  scores[:, tile_j] = x @ obT[:, tile_j]  (bf16 MXU, f32 acc)
# K-major RHS (pre-transposed once) -> plain jnp.dot, no per-tile XLU transpose.
# ----------------------------------------------------------------------------
def _scoring_kernel(x_ref, obT_ref, out_ref):
    out_ref[...] = jnp.dot(x_ref[...], obT_ref[...],
                           preferred_element_type=jnp.float32
                           ).astype(out_ref.dtype)


def _score(x_bf16, ent: PreppedEntities, *, scores_dtype=jnp.float32):
    B, D = x_bf16.shape
    obT, _, tile_n = ent
    n_pad = obT.shape[1]
    num_tiles = n_pad // tile_n
    out_isize = jnp.dtype(scores_dtype).itemsize

    cost = pl.CostEstimate(
        flops=2 * B * D * n_pad,
        transcendentals=0,
        bytes_accessed=B * D * 2 + n_pad * D * 2 + B * n_pad * out_isize)

    vmem_limit = max(32 << 20,
                     int((2 * (B * tile_n * out_isize + tile_n * D * 2)
                          + B * D * 2) * 1.25) + (2 << 20))

    # NOTE(v6e, small B): if the ob-tile DMA shows up exposed in a profile,
    # add pipeline_mode=pl.Buffered(3) to the obT BlockSpec.
    return pl.pallas_call(
        _scoring_kernel,
        out_shape=jax.ShapeDtypeStruct((B, n_pad), scores_dtype),
        grid=(num_tiles,),
        in_specs=[pl.BlockSpec((B, D), lambda j: (0, 0)),        # resident x
                  pl.BlockSpec((D, tile_n), lambda j: (0, j))],  # K-major ob
        out_specs=pl.BlockSpec((B, tile_n), lambda j: (0, j)),   # lane-dense
        compiler_params=pltpu.CompilerParams(
            dimension_semantics=("parallel",),                   # v7x 2 TCs
            vmem_limit_bytes=vmem_limit),
        cost_estimate=cost,
    )(x_bf16, obT)


# ----------------------------------------------------------------------------
# Forward wrappers
# ----------------------------------------------------------------------------
def convtranse_forward_prepped(sub, rel, weights: PreppedWeights,
                               entities: PreppedEntities,
                               *, scores_dtype=jnp.float32):
    """Production path: prep hoisted; returns PADDED (B, n_pad) scores.

    Padded entity columns score exactly 0 (not -inf): mask them downstream
    before any softmax/argmax.  scores_dtype=bf16 halves the dominant HBM
    write stream if the consumer tolerates ~3 mantissa digits.
    """
    # Bias cancellation + bn2 require training-mode batch statistics.
    assert sub.shape[0] > 1, "kernel assumes batch_size > 1 (bn2 active)"
    # TODO(synk): batch_size == 1 path (bn2 skipped in torch, fc bias live)
    # is not implemented.
    x = _activation(sub, rel, weights)
    return _score(x, entities, scores_dtype=scores_dtype)


def convtranse_forward(sub, rel, ob, conv_w, conv_b, fc_w, fc_b,
                       bn0_g, bn0_b, bn1_g, bn1_b, bn2_g, bn2_b,
                       *, entity_tile=1024, return_padded=False):
    """API-parity wrapper.  For decode loops, call prepare_* once and reuse."""
    w = prepare_weights(conv_w, conv_b, fc_w, fc_b,
                        bn0_g, bn0_b, bn1_g, bn1_b, bn2_g, bn2_b)
    ent = prepare_entities(ob, entity_tile=entity_tile,
                           max_batch=sub.shape[0])
    scores = convtranse_forward_prepped(sub, rel, w, ent)
    if return_padded:
        return scores            # padded columns are exactly 0
    # NOTE: this slice materializes a full copy; prefer return_padded=True in
    # HBM-bound production paths.
    return scores[:, :ent.n_valid]


# ----------------------------------------------------------------------------
# Pure-JAX (XLA) reference in the torch NCW convention (biases included).
# ----------------------------------------------------------------------------
def reference_forward(sub, rel, ob, conv_w, conv_b, fc_w, fc_b,
                      bn0_g, bn0_b, bn1_g, bn1_b, bn2_g, bn2_b):
    B, D = sub.shape
    C = conv_w.shape[0]
    x = jnp.stack([jnp.tanh(sub), rel], axis=1)                     # (B, 2, D)
    mu = x.mean(axis=(0, 2), keepdims=True)
    var = ((x - mu) ** 2).mean(axis=(0, 2), keepdims=True)
    x = (x - mu) / jnp.sqrt(var + EPS) * bn0_g[None, :, None] + bn0_b[None, :, None]

    xp = jnp.pad(x, ((0, 0), (0, 0), (1, 1)))
    conv = jnp.zeros((B, C, D), jnp.float32)
    for k in range(3):
        conv = conv + jnp.einsum("oi,bid->bod", conv_w[:, :, k], xp[:, :, k:k + D])
    conv = conv + conv_b[None, :, None]

    mu = conv.mean(axis=(0, 2), keepdims=True)
    var = ((conv - mu) ** 2).mean(axis=(0, 2), keepdims=True)
    conv = (conv - mu) / jnp.sqrt(var + EPS) * bn1_g[None, :, None] + bn1_b[None, :, None]
    conv = jnp.maximum(conv, 0.0)

    h = conv.reshape(B, -1)                                         # (B, C*D)
    x = h @ fc_w.T + fc_b
    mu = x.mean(axis=0, keepdims=True)
    var = ((x - mu) ** 2).mean(axis=0, keepdims=True)
    x = (x - mu) / jnp.sqrt(var + EPS) * bn2_g + bn2_b
    x = jnp.maximum(x, 0.0)
    return x @ ob.T


if __name__ == "__main__":
    # Small shapes consistent with the module: embedding_dim=32, channels=8,
    # a 300-row entity table (exercises padding, even-tile rounding, 4 tiles).
    B, D, C, N = 8, 32, 8, 300
    key = jax.random.PRNGKey(0)
    ks = jax.random.split(key, 12)

    sub = jax.random.normal(ks[0], (B, D), jnp.float32)
    rel = jax.random.normal(ks[1], (B, D), jnp.float32)
    ob = jax.random.normal(ks[2], (N, D), jnp.float32)

    conv_w = jax.random.normal(ks[3], (C, 2, 3), jnp.float32) * 0.2
    conv_b = jax.random.normal(ks[4], (C,), jnp.float32) * 0.1
    fc_w = jax.random.normal(ks[5], (D, C * D), jnp.float32) * 0.05
    fc_b = jax.random.normal(ks[6], (D,), jnp.float32) * 0.1

    bn0_g = 1.0 + 0.1 * jax.random.normal(ks[7], (2,), jnp.float32)
    bn0_b = 0.1 * jax.random.normal(ks[8], (2,), jnp.float32)
    bn1_g = 1.0 + 0.1 * jax.random.normal(ks[9], (C,), jnp.float32)
    bn1_b = 0.1 * jax.random.normal(ks[9], (C,), jnp.float32)
    bn2_g = 1.0 + 0.1 * jax.random.normal(ks[10], (D,), jnp.float32)
    bn2_b = 0.1 * jax.random.normal(ks[11], (D,), jnp.float32)

    # Hoisted, one-time prep (per weight / entity-table update).
    weights = prepare_weights(conv_w, conv_b, fc_w, fc_b,
                              bn0_g, bn0_b, bn1_g, bn1_b, bn2_g, bn2_b)
    entities = prepare_entities(ob, entity_tile=128, max_batch=B)

    scores_padded = convtranse_forward_prepped(sub, rel, weights, entities)
    scores_padded = jax.block_until_ready(scores_padded)

    ref = reference_forward(sub, rel, ob, conv_w, conv_b, fc_w, fc_b,
                            bn0_g, bn0_b, bn1_g, bn1_b, bn2_g, bn2_b)
    ref = jax.block_until_ready(ref)

    n_pad = entities.obT.shape[1]
    assert scores_padded.shape == (B, n_pad)
    # Padded entity columns score exactly 0 (mask them downstream if needed).
    assert bool(jnp.all(scores_padded[:, N:] == 0.0))

    out = scores_padded[:, :N]          # slice only for comparison in the test
    ref_scale = float(jnp.max(jnp.abs(ref)))
    max_err = float(jnp.max(jnp.abs(out - ref)))
    # Activation and scoring matmuls run in bf16 on the MXU (~3 decimal digits
    # of mantissa), so compare with a bf16-aware, scale-relative tolerance.
    assert max_err < 1e-1 * (1.0 + ref_scale), \
        f"mismatch vs reference: {max_err} (scale {ref_scale})"
    # TODO(synk): the registered parameter `b` (num_entities,) is never used
    # in the reference forward, so it is intentionally not materialized here.
    print("KERNEL_OK")
</pallas_src>

<mosaic_0001>
module attributes {stable_mosaic.version = 11 : i64} {
  func.func @_activation_kernel(%arg0: i32, %arg1: memref<8x32xf32, #tpu.memory_space<vmem>>, %arg2: memref<8x32xf32, #tpu.memory_space<vmem>>, %arg3: memref<2xf32, #tpu.memory_space<smem>>, %arg4: memref<2xf32, #tpu.memory_space<smem>>, %arg5: memref<8xf32, #tpu.memory_space<smem>>, %arg6: memref<8xf32, #tpu.memory_space<smem>>, %arg7: memref<8x32x32xbf16, #tpu.memory_space<vmem>>, %arg8: memref<8x32x32xbf16, #tpu.memory_space<vmem>>, %arg9: memref<8x32x32xbf16, #tpu.memory_space<vmem>>, %arg10: memref<1x32xf32, #tpu.memory_space<vmem>>, %arg11: memref<1x32xf32, #tpu.memory_space<vmem>>, %arg12: memref<8x32xbf16, #tpu.memory_space<vmem>>, %arg13: memref<8x32xf32, #tpu.memory_space<vmem>>) attributes {dimension_semantics = [#tpu.dimension_semantics<arbitrary>], iteration_bounds = array<i64: 1>, scalar_prefetch = 0 : i64, scratch_operands = 1 : i64, tpu.core_type = #tpu.core_type<tc>, window_params = [{pipeline_mode = #tpu.pipeline_mode<synchronous>, transform_indices = @transform_0, window_bounds = array<i64: 8, 32>}, {pipeline_mode = #tpu.pipeline_mode<synchronous>, transform_indices = @transform_1, window_bounds = array<i64: 8, 32>}, {transform_indices = @transform_2, window_bounds = array<i64: 2>}, {transform_indices = @transform_3, window_bounds = array<i64: 2>}, {transform_indices = @transform_4, window_bounds = array<i64: 8>}, {transform_indices = @transform_5, window_bounds = array<i64: 8>}, {pipeline_mode = #tpu.pipeline_mode<synchronous>, transform_indices = @transform_6, window_bounds = array<i64: 8, 32, 32>}, {pipeline_mode = #tpu.pipeline_mode<synchronous>, transform_indices = @transform_7, window_bounds = array<i64: 8, 32, 32>}, {pipeline_mode = #tpu.pipeline_mode<synchronous>, transform_indices = @transform_8, window_bounds = array<i64: 8, 32, 32>}, {pipeline_mode = #tpu.pipeline_mode<synchronous>, transform_indices = @transform_9, window_bounds = array<i64: 1, 32>}, {pipeline_mode = #tpu.pipeline_mode<synchronous>, transform_indices = @transform_10, window_bounds = array<i64: 1, 32>}, {pipeline_mode = #tpu.pipeline_mode<synchronous>, transform_indices = @transform_11, window_bounds = array<i64: 8, 32>}]} {
    %c0 = arith.constant 0 : index
    %c0_0 = arith.constant 0 : index
    %0 = vector.load %arg1[%c0, %c0_0] : memref<8x32xf32, #tpu.memory_space<vmem>>, vector<8x32xf32>
    %1 = math.tanh %0 : vector<8x32xf32>
    %c0_1 = arith.constant 0 : index
    %2 = memref.load %arg3[%c0_1] : memref<2xf32, #tpu.memory_space<smem>>
    %c0_2 = arith.constant 0 : index
    %3 = memref.load %arg4[%c0_2] : memref<2xf32, #tpu.memory_space<smem>>
    %4 = vector.shape_cast %1 : vector<8x32xf32> to vector<1x8x32xf32>
    %cst = arith.constant dense<0.000000e+00> : vector<1xf32>
    %5 = vector.multi_reduction <add>, %4, %cst [1, 2] : vector<1x8x32xf32> to vector<1xf32>
    %6 = vector.shape_cast %5 : vector<1xf32> to vector<1x1x1xf32>
    %7 = vector.extract %6[0, 0, 0] : f32 from vector<1x1x1xf32>
    %cst_3 = arith.constant 2.560000e+02 : f32
    %8 = arith.divf %7, %cst_3 : f32
    %9 = vector.broadcast %8 : f32 to vector<8x32xf32>
    %10 = arith.subf %1, %9 : vector<8x32xf32>
    %11 = arith.mulf %10, %10 : vector<8x32xf32>
    %12 = vector.shape_cast %11 : vector<8x32xf32> to vector<1x8x32xf32>
    %cst_4 = arith.constant dense<0.000000e+00> : vector<1xf32>
    %13 = vector.multi_reduction <add>, %12, %cst_4 [1, 2] : vector<1x8x32xf32> to vector<1xf32>
    %14 = vector.shape_cast %13 : vector<1xf32> to vector<1x1x1xf32>
    %15 = vector.extract %14[0, 0, 0] : f32 from vector<1x1x1xf32>
    %cst_5 = arith.constant 2.560000e+02 : f32
    %16 = arith.divf %15, %cst_5 : f32
    %cst_6 = arith.constant 9.99999974E-6 : f32
    %17 = arith.addf %16, %cst_6 : f32
    %18 = math.rsqrt %17 : f32
    %19 = vector.broadcast %18 : f32 to vector<8x32xf32>
    %20 = arith.mulf %10, %19 : vector<8x32xf32>
    %21 = vector.broadcast %2 : f32 to vector<8x32xf32>
    %22 = arith.mulf %20, %21 : vector<8x32xf32>
    %23 = vector.broadcast %3 : f32 to vector<8x32xf32>
    %24 = arith.addf %22, %23 : vector<8x32xf32>
    %25 = arith.truncf %24 : vector<8x32xf32> to vector<8x32xbf16>
    %c0_7 = arith.constant 0 : index
    %c0_8 = arith.constant 0 : index
    %26 = vector.load %arg2[%c0_7, %c0_8] : memref<8x32xf32, #tpu.memory_space<vmem>>, vector<8x32xf32>
    %c1 = arith.constant 1 : index
    %27 = memref.load %arg3[%c1] : memref<2xf32, #tpu.memory_space<smem>>
    %c1_9 = arith.constant 1 : index
    %28 = memref.load %arg4[%c1_9] : memref<2xf32, #tpu.memory_space<smem>>
    %29 = vector.shape_cast %26 : vector<8x32xf32> to vector<1x8x32xf32>
    %cst_10 = arith.constant dense<0.000000e+00> : vector<1xf32>
    %30 = vector.multi_reduction <add>, %29, %cst_10 [1, 2] : vector<1x8x32xf32> to vector<1xf32>
    %31 = vector.shape_cast %30 : vector<1xf32> to vector<1x1x1xf32>
    %32 = vector.extract %31[0, 0, 0] : f32 from vector<1x1x1xf32>
    %cst_11 = arith.constant 2.560000e+02 : f32
    %33 = arith.divf %32, %cst_11 : f32
    %34 = vector.broadcast %33 : f32 to vector<8x32xf32>
    %35 = arith.subf %26, %34 : vector<8x32xf32>
    %36 = arith.mulf %35, %35 : vector<8x32xf32>
    %37 = vector.shape_cast %36 : vector<8x32xf32> to vector<1x8x32xf32>
    %cst_12 = arith.constant dense<0.000000e+00> : vector<1xf32>
    %38 = vector.multi_reduction <add>, %37, %cst_12 [1, 2] : vector<1x8x32xf32> to vector<1xf32>
    %39 = vector.shape_cast %38 : vector<1xf32> to vector<1x1x1xf32>
    %40 = vector.extract %39[0, 0, 0] : f32 from vector<1x1x1xf32>
    %cst_13 = arith.constant 2.560000e+02 : f32
    %41 = arith.divf %40, %cst_13 : f32
    %cst_14 = arith.constant 9.99999974E-6 : f32
    %42 = arith.addf %41, %cst_14 : f32
    %43 = math.rsqrt %42 : f32
    %44 = vector.broadcast %43 : f32 to vector<8x32xf32>
    %45 = arith.mulf %35, %44 : vector<8x32xf32>
    %46 = vector.broadcast %27 : f32 to vector<8x32xf32>
    %47 = arith.mulf %45, %46 : vector<8x32xf32>
    %48 = vector.broadcast %28 : f32 to vector<8x32xf32>
    %49 = arith.addf %47, %48 : vector<8x32xf32>
    %50 = arith.truncf %49 : vector<8x32xf32> to vector<8x32xbf16>
    %cst_15 = arith.constant 0.000000e+00 : f32
    %51 = vector.broadcast %cst_15 : f32 to vector<8x32xf32>
    %c0_16 = arith.constant 0 : index
    %c0_17 = arith.constant 0 : index
    %52 = vector.load %arg13[%c0_16, %c0_17] : memref<8x32xf32, #tpu.memory_space<vmem>>, vector<8x32xf32>
    tpu.vector_store %arg13[%c0_16, %c0_17], %51 {strides = array<i32>} : memref<8x32xf32, #tpu.memory_space<vmem>>, vector<8x32xf32>,
    %c0_i32 = arith.constant 0 : i32
    %c8_i32 = arith.constant 8 : i32
    %53 = arith.addi %c0_i32, %c8_i32 : i32
    %c1_i32 = arith.constant 1 : i32
    scf.for %arg14 = %c0_i32 to %53 step %c1_i32  : i32 {
      %c1_i32_33 = arith.constant 1 : i32
      %81 = arith.muli %arg14, %c1_i32_33 : i32
      %c0_i32_34 = arith.constant 0 : i32
      %82 = arith.addi %c0_i32_34, %81 : i32
      %83 = arith.index_cast %82 : i32 to index
      %c0_35 = arith.constant 0 : index
      %c0_36 = arith.constant 0 : index
      %84 = vector.load %arg7[%83, %c0_35, %c0_36] : memref<8x32x32xbf16, #tpu.memory_space<vmem>>, vector<1x32x32xbf16>
      %85 = vector.shape_cast %84 : vector<1x32x32xbf16> to vector<32x32xbf16>
      %cst_37 = arith.constant dense<0.000000e+00> : vector<8x32xf32>
      %86 = tpu.matmul %25, %85, %cst_37 {dimension_numbers = #tpu.dot_dimension_numbers<[1], [0], [0], [1], [0, 0, 1, 1], [], []>} : vector<8x32xbf16>, vector<32x32xbf16>, vector<8x32xf32> -> vector<8x32xf32>
      %87 = arith.index_cast %82 : i32 to index
      %c0_38 = arith.constant 0 : index
      %c0_39 = arith.constant 0 : index
      %88 = vector.load %arg8[%87, %c0_38, %c0_39] : memref<8x32x32xbf16, #tpu.memory_space<vmem>>, vector<1x32x32xbf16>
      %89 = vector.shape_cast %88 : vector<1x32x32xbf16> to vector<32x32xbf16>
      %cst_40 = arith.constant dense<0.000000e+00> : vector<8x32xf32>
      %90 = tpu.matmul %50, %89, %cst_40 {dimension_numbers = #tpu.dot_dimension_numbers<[1], [0], [0], [1], [0, 0, 1, 1], [], []>} : vector<8x32xbf16>, vector<32x32xbf16>, vector<8x32xf32> -> vector<8x32xf32>
      %91 = arith.addf %86, %90 : vector<8x32xf32>
      %92 = vector.shape_cast %91 : vector<8x32xf32> to vector<1x8x32xf32>
      %cst_41 = arith.constant dense<0.000000e+00> : vector<1xf32>
      %93 = vector.multi_reduction <add>, %92, %cst_41 [1, 2] : vector<1x8x32xf32> to vector<1xf32>
      %94 = vector.shape_cast %93 : vector<1xf32> to vector<1x1x1xf32>
      %95 = vector.extract %94[0, 0, 0] : f32 from vector<1x1x1xf32>
      %cst_42 = arith.constant 2.560000e+02 : f32
      %96 = arith.divf %95, %cst_42 : f32
      %97 = vector.broadcast %96 : f32 to vector<8x32xf32>
      %98 = arith.subf %91, %97 : vector<8x32xf32>
      %99 = arith.mulf %98, %98 : vector<8x32xf32>
      %100 = vector.shape_cast %99 : vector<8x32xf32> to vector<1x8x32xf32>
      %cst_43 = arith.constant dense<0.000000e+00> : vector<1xf32>
      %101 = vector.multi_reduction <add>, %100, %cst_43 [1, 2] : vector<1x8x32xf32> to vector<1xf32>
      %102 = vector.shape_cast %101 : vector<1xf32> to vector<1x1x1xf32>
      %103 = vector.extract %102[0, 0, 0] : f32 from vector<1x1x1xf32>
      %cst_44 = arith.constant 2.560000e+02 : f32
      %104 = arith.divf %103, %cst_44 : f32
      %cst_45 = arith.constant 9.99999974E-6 : f32
      %105 = arith.addf %104, %cst_45 : f32
      %106 = math.rsqrt %105 : f32
      %107 = vector.broadcast %106 : f32 to vector<8x32xf32>
      %108 = arith.mulf %98, %107 : vector<8x32xf32>
      %109 = arith.index_cast %82 : i32 to index
      %110 = memref.load %arg5[%109] : memref<8xf32, #tpu.memory_space<smem>>
      %111 = vector.broadcast %110 : f32 to vector<8x32xf32>
      %112 = arith.mulf %108, %111 : vector<8x32xf32>
      %113 = arith.index_cast %82 : i32 to index
      %114 = memref.load %arg6[%113] : memref<8xf32, #tpu.memory_space<smem>>
      %115 = vector.broadcast %114 : f32 to vector<8x32xf32>
      %116 = arith.addf %112, %115 : vector<8x32xf32>
      %cst_46 = arith.constant 0.000000e+00 : f32
      %117 = vector.broadcast %cst_46 : f32 to vector<8x32xf32>
      %118 = arith.maximumf %116, %117 : vector<8x32xf32>
      %119 = arith.truncf %118 : vector<8x32xf32> to vector<8x32xbf16>
      %c0_47 = arith.constant 0 : index
      %c0_48 = arith.constant 0 : index
      %120 = vector.load %arg13[%c0_47, %c0_48] : memref<8x32xf32, #tpu.memory_space<vmem>>, vector<8x32xf32>
      %121 = arith.index_cast %82 : i32 to index
      %c0_49 = arith.constant 0 : index
      %c0_50 = arith.constant 0 : index
      %122 = vector.load %arg9[%121, %c0_49, %c0_50] : memref<8x32x32xbf16, #tpu.memory_space<vmem>>, vector<1x32x32xbf16>
      %123 = vector.shape_cast %122 : vector<1x32x32xbf16> to vector<32x32xbf16>
      %cst_51 = arith.constant dense<0.000000e+00> : vector<8x32xf32>
      %124 = tpu.matmul %119, %123, %cst_51 {dimension_numbers = #tpu.dot_dimension_numbers<[1], [0], [0], [1], [0, 0, 1, 1], [], []>} : vector<8x32xbf16>, vector<32x32xbf16>, vector<8x32xf32> -> vector<8x32xf32>
      %125 = arith.addf %120, %124 : vector<8x32xf32>
      %c0_52 = arith.constant 0 : index
      %c0_53 = arith.constant 0 : index
      %126 = vector.load %arg13[%c0_52, %c0_53] : memref<8x32xf32, #tpu.memory_space<vmem>>, vector<8x32xf32>
      tpu.vector_store %arg13[%c0_52, %c0_53], %125 {strides = array<i32>} : memref<8x32xf32, #tpu.memory_space<vmem>>, vector<8x32xf32>,
    }
    %c8_i32_18 = arith.constant 8 : i32
    %c0_19 = arith.constant 0 : index
    %c0_20 = arith.constant 0 : index
    %54 = vector.load %arg13[%c0_19, %c0_20] : memref<8x32xf32, #tpu.memory_space<vmem>>, vector<8x32xf32>
    %cst_21 = arith.constant dense<0.000000e+00> : vector<32xf32>
    %55 = vector.multi_reduction <add>, %54, %cst_21 [0] : vector<8x32xf32> to vector<32xf32>
    %56 = vector.shape_cast %55 : vector<32xf32> to vector<1x32xf32>
    %cst_22 = arith.constant 8.000000e+00 : f32
    %57 = vector.broadcast %cst_22 : f32 to vector<1x32xf32>
    %58 = arith.divf %56, %57 : vector<1x32xf32>
    %59 = vector.broadcast %58 : vector<1x32xf32> to vector<8x32xf32>
    %60 = arith.subf %54, %59 : vector<8x32xf32>
    %61 = arith.mulf %60, %60 : vector<8x32xf32>
    %cst_23 = arith.constant dense<0.000000e+00> : vector<32xf32>
    %62 = vector.multi_reduction <add>, %61, %cst_23 [0] : vector<8x32xf32> to vector<32xf32>
    %63 = vector.shape_cast %62 : vector<32xf32> to vector<1x32xf32>
    %cst_24 = arith.constant 8.000000e+00 : f32
    %64 = vector.broadcast %cst_24 : f32 to vector<1x32xf32>
    %65 = arith.divf %63, %64 : vector<1x32xf32>
    %cst_25 = arith.constant 9.99999974E-6 : f32
    %66 = vector.broadcast %cst_25 : f32 to vector<1x32xf32>
    %67 = arith.addf %65, %66 : vector<1x32xf32>
    %68 = math.rsqrt %67 : vector<1x32xf32>
    %69 = vector.broadcast %68 : vector<1x32xf32> to vector<8x32xf32>
    %70 = arith.mulf %60, %69 : vector<8x32xf32>
    %c0_26 = arith.constant 0 : index
    %c0_27 = arith.constant 0 : index
    %71 = vector.load %arg10[%c0_26, %c0_27] : memref<1x32xf32, #tpu.memory_space<vmem>>, vector<1x32xf32>
    %72 = vector.broadcast %71 : vector<1x32xf32> to vector<8x32xf32>
    %73 = arith.mulf %70, %72 : vector<8x32xf32>
    %c0_28 = arith.constant 0 : index
    %c0_29 = arith.constant 0 : index
    %74 = vector.load %arg11[%c0_28, %c0_29] : memref<1x32xf32, #tpu.memory_space<vmem>>, vector<1x32xf32>
    %75 = vector.broadcast %74 : vector<1x32xf32> to vector<8x32xf32>
    %76 = arith.addf %73, %75 : vector<8x32xf32>
    %cst_30 = arith.constant 0.000000e+00 : f32
    %77 = vector.broadcast %cst_30 : f32 to vector<8x32xf32>
    %78 = arith.maximumf %76, %77 : vector<8x32xf32>
    %79 = arith.truncf %78 : vector<8x32xf32> to vector<8x32xbf16>
    %c0_31 = arith.constant 0 : index
    %c0_32 = arith.constant 0 : index
    %80 = vector.load %arg12[%c0_31, %c0_32] : memref<8x32xbf16, #tpu.memory_space<vmem>>, vector<8x32xbf16>
    tpu.vector_store %arg12[%c0_31, %c0_32], %79 {strides = array<i32>} : memref<8x32xbf16, #tpu.memory_space<vmem>>, vector<8x32xbf16>,
    return
  }
  func.func @transform_0(%arg0: i32) -> (i32, i32) {
    %c0_i32 = arith.constant 0 : i32
    %c0_i32_0 = arith.constant 0 : i32
    %c0_i32_1 = arith.constant 0 : i32
    return %c0_i32, %c0_i32_0 : i32, i32
  }
  func.func @transform_1(%arg0: i32) -> (i32, i32) {
    %c0_i32 = arith.constant 0 : i32
    %c0_i32_0 = arith.constant 0 : i32
    %c0_i32_1 = arith.constant 0 : i32
    return %c0_i32, %c0_i32_0 : i32, i32
  }
  func.func @transform_2(%arg0: i32) -> i32 {
    %c0_i32 = arith.constant 0 : i32
    %c0_i32_0 = arith.constant 0 : i32
    return %c0_i32 : i32
  }
  func.func @transform_3(%arg0: i32) -> i32 {
    %c0_i32 = arith.constant 0 : i32
    %c0_i32_0 = arith.constant 0 : i32
    return %c0_i32 : i32
  }
  func.func @transform_4(%arg0: i32) -> i32 {
    %c0_i32 = arith.constant 0 : i32
    %c0_i32_0 = arith.constant 0 : i32
    return %c0_i32 : i32
  }
  func.func @transform_5(%arg0: i32) -> i32 {
    %c0_i32 = arith.constant 0 : i32
    %c0_i32_0 = arith.constant 0 : i32
    return %c0_i32 : i32
  }
  func.func @transform_6(%arg0: i32) -> (i32, i32, i32) {
    %c0_i32 = arith.constant 0 : i32
    %c0_i32_0 = arith.constant 0 : i32
    %c0_i32_1 = arith.constant 0 : i32
    %c0_i32_2 = arith.constant 0 : i32
    return %c0_i32, %c0_i32_0, %c0_i32_1 : i32, i32, i32
  }
  func.func @transform_7(%arg0: i32) -> (i32, i32, i32) {
    %c0_i32 = arith.constant 0 : i32
    %c0_i32_0 = arith.constant 0 : i32
    %c0_i32_1 = arith.constant 0 : i32
    %c0_i32_2 = arith.constant 0 : i32
    return %c0_i32, %c0_i32_0, %c0_i32_1 : i32, i32, i32
  }
  func.func @transform_8(%arg0: i32) -> (i32, i32, i32) {
    %c0_i32 = arith.constant 0 : i32
    %c0_i32_0 = arith.constant 0 : i32
    %c0_i32_1 = arith.constant 0 : i32
    %c0_i32_2 = arith.constant 0 : i32
    return %c0_i32, %c0_i32_0, %c0_i32_1 : i32, i32, i32
  }
  func.func @transform_9(%arg0: i32) -> (i32, i32) {
    %c0_i32 = arith.constant 0 : i32
    %c0_i32_0 = arith.constant 0 : i32
    %c0_i32_1 = arith.constant 0 : i32
    return %c0_i32, %c0_i32_0 : i32, i32
  }
  func.func @transform_10(%arg0: i32) -> (i32, i32) {
    %c0_i32 = arith.constant 0 : i32
    %c0_i32_0 = arith.constant 0 : i32
    %c0_i32_1 = arith.constant 0 : i32
    return %c0_i32, %c0_i32_0 : i32, i32
  }
  func.func @transform_11(%arg0: i32) -> (i32, i32) {
    %c0_i32 = arith.constant 0 : i32
    %c0_i32_0 = arith.constant 0 : i32
    %c0_i32_1 = arith.constant 0 : i32
    return %c0_i32, %c0_i32_0 : i32, i32
  }
}

</mosaic_0001>

<llo_original>
// kernel: tpu_custom_call.1
$region0: #{tpu_custom_call.1}
  #allocation0 [shape = 'u32[]', space=smem, size = 0x4, offset = 0x4, fixed_abs, tag = 'smem constant byte address 0x4 - core index']
  #allocation1 [shape = 'u32[144,128]{1,0:T(1,128)}', space=vmem, size = 0x12000, scoped, tag = 'internal scratch']
  #allocation2 [shape = 'f32[8,32]{1,0:T(8,128)}', space=vmem, size = 0x1000, scoped, tag = 'scratch operand']
  %s0 = inlined_call_operand.hbm [shape: f32[8,32], index: 0, kind: input, shape index: {}]
  %s1 = inlined_call_operand.hbm [shape: f32[8,32], index: 1, kind: input, shape index: {}]
  %s2 = inlined_call_operand.vmem [shape: f32[2], index: 2, kind: input, shape index: {}]
  %s3 = inlined_call_operand.vmem [shape: f32[2], index: 3, kind: input, shape index: {}]
  %s4 = inlined_call_operand.vmem [shape: f32[8], index: 4, kind: input, shape index: {}]
  %s5 = inlined_call_operand.vmem [shape: f32[8], index: 5, kind: input, shape index: {}]
  %s6 = inlined_call_operand.hbm [shape: bf16[8,32,32], index: 6, kind: input, shape index: {}]
  %s7 = inlined_call_operand.hbm [shape: bf16[8,32,32], index: 7, kind: input, shape index: {}]
  %s8 = inlined_call_operand.hbm [shape: bf16[8,32,32], index: 8, kind: input, shape index: {}]
  %s9 = inlined_call_operand.vmem [shape: f32[1,32], index: 9, kind: input, shape index: {}]
  %s10 = inlined_call_operand.vmem [shape: f32[1,32], index: 10, kind: input, shape index: {}]
  %s11 = inlined_call_operand.hbm [shape: bf16[8,32], index: 11, kind: output, shape index: {}]
  %s12 = sld [smem:[#allocation0]]
  $region97: #{tpu_custom_call.1} parent=0
    _
  %s14 = ssub.s32 1, %s12
  %s15 = scalar_select 0, %s14, %s12
  $region1: #{tpu_custom_call.1} parent=0
    #allocation3 [shape = 'u8[4096]{0}', space=vmem, size = 0x1000, scoped, tag = 'input window, operand 0, single buffered']
    #allocation4 [shape = 's32[1]{0}', space=sflag, size = 0x4, scoped, tag = 'scoped memory for tpu_custom_call.1']
    #allocation5 [shape = 's32[1]{0}', space=sflag, size = 0x4, scoped, tag = 'scoped memory for tpu_custom_call.1']
    #allocation6 [shape = 's32[1]{0}', space=sflag, size = 0x4, scoped, tag = 'scoped memory for tpu_custom_call.1']
    #allocation7 [shape = 'u8[4096]{0}', space=vmem, size = 0x1000, scoped, tag = 'input window, operand 1, single buffered']
    #allocation8 [shape = 's32[1]{0}', space=sflag, size = 0x4, scoped, tag = 'scoped memory for tpu_custom_call.1']
    #allocation9 [shape = 'u8[512]{0}', space=smem, size = 0x200, scoped, tag = 'input window, operand 2, single buffered']
    #allocation10 [shape = 'u8[512]{0}', space=smem, size = 0x200, scoped, tag = 'input window, operand 3, single buffered']
    #allocation11 [shape = 's32[1]{0}', space=sflag, size = 0x4, scoped, tag = 'scoped memory for tpu_custom_call.1']
    #allocation12 [shape = 'u8[512]{0}', space=smem, size = 0x200, scoped, tag = 'input window, operand 4, single buffered']
    #allocation13 [shape = 'u8[512]{0}', space=smem, size = 0x200, scoped, tag = 'input window, operand 5, single buffered']
    #allocation14 [shape = 's32[1]{0}', space=sflag, size = 0x4, scoped, tag = 'scoped memory for tpu_custom_call.1']
    #allocation15 [shape = 'u8[65536]{0}', space=vmem, size = 0x10000, scoped, tag = 'input window, operand 6, single buffered']
    #allocation16 [shape = 'u8[65536]{0}', space=vmem, size = 0x10000, scoped, tag = 'input window, operand 7, single buffered']
    #allocation17 [shape = 's32[1]{0}', space=sflag, size = 0x4, scoped, tag = 'scoped memory for tpu_custom_call.1']
    #allocation18 [shape = 'u8[65536]{0}', space=vmem, size = 0x10000, scoped, tag = 'input window, operand 8, single buffered']
    #allocation19 [shape = 'u8[2048]{0}', space=vmem, size = 0x800, scoped, tag = 'output window, operand 0, single buffered']
    %16 = vsyncpa [#allocation4], 0
    %17 = vsyncpa [#allocation8], 0
    %18 = vsyncpa [#allocation6], 0
    %19 = vsyncpa [#allocation11], 0
    %20 = vsyncpa [#allocation14], 0
    %21 = vsyncpa [#allocation17], 0
    %22 = vsyncpa [#allocation5], 0
    // Predicated region
    $region2: #{tpu_custom_call.1} parent=1 // pred_check
      _
    $region3: #{tpu_custom_call.1} parent=1 // pred_check_branch
      %24 = sbr.rel (0) target = $region5
    $region4: #{tpu_custom_call.1} parent=1 // pred_region
      %s26 = ssub.s32 128, 128
      %27 = vsyncadd [#allocation4], %s26
      %s29 = sshll.u32 [#allocation3], 4
      %s30 = int_to_ptr.vmem [resolvable:$true] %s29
      %32 = dma.hbm_to_vmem [thread:$0]  %s0, 128, %s30, [#allocation4]
    $region5: #{tpu_custom_call.1} parent=1 // pred_fallthru
      _
    // Predicated region
    $region6: #{tpu_custom_call.1} parent=1 // pred_check
      _
    $region7: #{tpu_custom_call.1} parent=1 // pred_check_branch
      %34 = sbr.rel (0) target = $region9
    $region8: #{tpu_custom_call.1} parent=1 // pred_region
      %s36 = ssub.s32 128, 128
      %37 = vsyncadd [#allocation8], %s36
      %s39 = sshll.u32 [#allocation7], 4
      %s40 = int_to_ptr.vmem [resolvable:$true] %s39
      %42 = dma.hbm_to_vmem [thread:$0]  %s1, 128, %s40, [#allocation8]
    $region9: #{tpu_custom_call.1} parent=1 // pred_fallthru
      _
    // Predicated region
    $region10: #{tpu_custom_call.1} parent=1 // pred_check
      _
    $region11: #{tpu_custom_call.1} parent=1 // pred_check_branch
      %44 = sbr.rel (0) target = $region13
    $region12: #{tpu_custom_call.1} parent=1 // pred_region
      %s46 = ssub.s32 16, 16
      %47 = vsyncadd [#allocation6], %s46
      %s49 = sshll.u32 %s2, 4
      %s50 = int_to_ptr.vmem [resolvable:$true] %s49
      %52 = dma.vmem_to_smem %s50, 16, [#allocation9], [#allocation6]
    $region13: #{tpu_custom_call.1} parent=1 // pred_fallthru
      _
    // Predicated region
    $region14: #{tpu_custom_call.1} parent=1 // pred_check
      _
    $region15: #{tpu_custom_call.1} parent=1 // pred_check_branch
      %54 = sbr.rel (0) target = $region17
    $region16: #{tpu_custom_call.1} parent=1 // pred_region
      %s56 = ssub.s32 16, 16
      %57 = vsyncadd [#allocation11], %s56
      %s59 = sshll.u32 %s3, 4
      %s60 = int_to_ptr.vmem [resolvable:$true] %s59
      %62 = dma.vmem_to_smem %s60, 16, [#allocation10], [#allocation11]
    $region17: #{tpu_custom_call.1} parent=1 // pred_fallthru
      _
    // Predicated region
    $region18: #{tpu_custom_call.1} parent=1 // pred_check
      _
    $region19: #{tpu_custom_call.1} parent=1 // pred_check_branch
      %64 = sbr.rel (0) target = $region21
    $region20: #{tpu_custom_call.1} parent=1 // pred_region
      %s66 = ssub.s32 16, 16
      %67 = vsyncadd [#allocation11], %s66
      %s69 = sshll.u32 %s4, 4
      %s70 = int_to_ptr.vmem [resolvable:$true] %s69
      %72 = dma.vmem_to_smem %s70, 16, [#allocation12], [#allocation11]
    $region21: #{tpu_custom_call.1} parent=1 // pred_fallthru
      _
    // Predicated region
    $region22: #{tpu_custom_call.1} parent=1 // pred_check
      _
    $region23: #{tpu_custom_call.1} parent=1 // pred_check_branch
      %74 = sbr.rel (0) target = $region25
    $region24: #{tpu_custom_call.1} parent=1 // pred_region
      %s76 = ssub.s32 16, 16
      %77 = vsyncadd [#allocation14], %s76
      %s79 = sshll.u32 %s5, 4
      %s80 = int_to_ptr.vmem [resolvable:$true] %s79
      %82 = dma.vmem_to_smem %s80, 16, [#allocation13], [#allocation14]
    $region25: #{tpu_custom_call.1} parent=1 // pred_fallthru
      _
    // Predicated region
    $region26: #{tpu_custom_call.1} parent=1 // pred_check
      _
    $region27: #{tpu_custom_call.1} parent=1 // pred_check_branch
      %84 = sbr.rel (0) target = $region29
    $region28: #{tpu_custom_call.1} parent=1 // pred_region
      %s86 = ssub.s32 2048, 2048
      %87 = vsyncadd [#allocation8], %s86
      %s88 = sshll.u32 [#allocation15], 4
      %s89 = int_to_ptr.vmem [resolvable:$true] %s88
      %94 = dma.hbm_to_vmem [thread:$0]  %s6, 2048, %s89, [#allocation8], 64, 64, 4
    $region29: #{tpu_custom_call.1} parent=1 // pred_fallthru
      _
    // Predicated region
    $region30: #{tpu_custom_call.1} parent=1 // pred_check
      _
    $region31: #{tpu_custom_call.1} parent=1 // pred_check_branch
      %96 = sbr.rel (0) target = $region33
    $region32: #{tpu_custom_call.1} parent=1 // pred_region
      %s98 = ssub.s32 2048, 2048
      %99 = vsyncadd [#allocation17], %s98
      %s100 = sshll.u32 [#allocation16], 4
      %s101 = int_to_ptr.vmem [resolvable:$true] %s100
      %106 = dma.hbm_to_vmem [thread:$0]  %s7, 2048, %s101, [#allocation17], 64, 64, 4
    $region33: #{tpu_custom_call.1} parent=1 // pred_fallthru
      _
    // Predicated region
    $region34: #{tpu_custom_call.1} parent=1 // pred_check
      _
    $region35: #{tpu_custom_call.1} parent=1 // pred_check_branch
      %108 = sbr.rel (0) target = $region37
    $region36: #{tpu_custom_call.1} parent=1 // pred_region
      %s110 = ssub.s32 2048, 2048
      %111 = vsyncadd [#allocation17], %s110
      %s112 = sshll.u32 [#allocation18], 4
      %s113 = int_to_ptr.vmem [resolvable:$true] %s112
      %118 = dma.hbm_to_vmem [thread:$0]  %s8, 2048, %s113, [#allocation17], 64, 64, 4
    $region37: #{tpu_custom_call.1} parent=1 // pred_fallthru
      _
    // Predicated region
    $region38: #{tpu_custom_call.1} parent=1 // pred_check
      _
    $region39: #{tpu_custom_call.1} parent=1 // pred_check_branch
      %120 = sbr.rel (0) target = $region41
    $region40: #{tpu_custom_call.1} parent=1 // pred_region
      _
    $region41: #{tpu_custom_call.1} parent=1 // pred_fallthru
      _
    // Predicated region
    $region42: #{tpu_custom_call.1} parent=1 // pred_check
      _
    $region43: #{tpu_custom_call.1} parent=1 // pred_check_branch
      %122 = sbr.rel (0) target = $region45
    $region44: #{tpu_custom_call.1} parent=1 // pred_region
      _
    $region45: #{tpu_custom_call.1} parent=1 // pred_fallthru
      _
    // Predicated region
    $region46: #{tpu_custom_call.1} parent=1 // pred_check
      _
    $region47: #{tpu_custom_call.1} parent=1 // pred_check_branch
      %124 = sbr.rel (0) target = $region49
    $region48: #{tpu_custom_call.1} parent=1 // pred_region
      %125 = dma.done [#allocation4], 128
    $region49: #{tpu_custom_call.1} parent=1 // pred_fallthru
      _
    // Predicated region
    $region50: #{tpu_custom_call.1} parent=1 // pred_check
      _
    $region51: #{tpu_custom_call.1} parent=1 // pred_check_branch
      %127 = sbr.rel (0) target = $region53
    $region52: #{tpu_custom_call.1} parent=1 // pred_region
      %128 = dma.done [#allocation8], 128
    $region53: #{tpu_custom_call.1} parent=1 // pred_fallthru
      _
    // Predicated region
    $region54: #{tpu_custom_call.1} parent=1 // pred_check
      _
    $region55: #{tpu_custom_call.1} parent=1 // pred_check_branch
      %130 = sbr.rel (0) target = $region57
    $region56: #{tpu_custom_call.1} parent=1 // pred_region
      %131 = dma.done [#allocation6], 16
    $region57: #{tpu_custom_call.1} parent=1 // pred_fallthru
      _
    // Predicated region
    $region58: #{tpu_custom_call.1} parent=1 // pred_check
      _
    $region59: #{tpu_custom_call.1} parent=1 // pred_check_branch
      %133 = sbr.rel (0) target = $region61
    $region60: #{tpu_custom_call.1} parent=1 // pred_region
      %134 = dma.done [#allocation11], 16
    $region61: #{tpu_custom_call.1} parent=1 // pred_fallthru
      _
    // Predicated region
    $region62: #{tpu_custom_call.1} parent=1 // pred_check
      _
    $region63: #{tpu_custom_call.1} parent=1 // pred_check_branch
      %136 = sbr.rel (0) target = $region65
    $region64: #{tpu_custom_call.1} parent=1 // pred_region
      %137 = dma.done [#allocation11], 16
    $region65: #{tpu_custom_call.1} parent=1 // pred_fallthru
      _
    // Predicated region
    $region66: #{tpu_custom_call.1} parent=1 // pred_check
      _
    $region67: #{tpu_custom_call.1} parent=1 // pred_check_branch
      %139 = sbr.rel (0) target = $region69
    $region68: #{tpu_custom_call.1} parent=1 // pred_region
      %140 = dma.done [#allocation14], 16
    $region69: #{tpu_custom_call.1} parent=1 // pred_fallthru
      _
    // Predicated region
    $region70: #{tpu_custom_call.1} parent=1 // pred_check
      _
    $region71: #{tpu_custom_call.1} parent=1 // pred_check_branch
      %142 = sbr.rel (0) target = $region73
    $region72: #{tpu_custom_call.1} parent=1 // pred_region
      %143 = dma.done [#allocation8], 2048
    $region73: #{tpu_custom_call.1} parent=1 // pred_fallthru
      _
    // Predicated region
    $region74: #{tpu_custom_call.1} parent=1 // pred_check
      _
    $region75: #{tpu_custom_call.1} parent=1 // pred_check_branch
      %145 = sbr.rel (0) target = $region77
    $region76: #{tpu_custom_call.1} parent=1 // pred_region
      %146 = dma.done [#allocation17], 2048
    $region77: #{tpu_custom_call.1} parent=1 // pred_fallthru
      _
    // Predicated region
    $region78: #{tpu_custom_call.1} parent=1 // pred_check
      _
    $region79: #{tpu_custom_call.1} parent=1 // pred_check_branch
      %148 = sbr.rel (0) target = $region81
    $region80: #{tpu_custom_call.1} parent=1 // pred_region
      %149 = dma.done [#allocation17], 2048
    $region81: #{tpu_custom_call.1} parent=1 // pred_fallthru
      _
    %150 = sfence
    %v152 = vld [vmem:[#allocation3] sm:$0xff]
    %v153 = vtanh.pop %v152
    %s154 = sld [smem:[#allocation9]]
    %s155 = sld [smem:[#allocation10]]
    %vm156 = vcmask 261120
    %v157 = vsel %vm156, %v153, 0.0
    %158 = vadd.xlane.f32.xlu0 %v157
    %v159 = vpop.xlane.xlu0 %158
    %v160 = vrot.slane %v159, 4
    %v161 = vadd.f32 %v159, %v160
    %v162 = vrot.slane %v161, 2
    %v163 = vadd.f32 %v161, %v162
    %v164 = vrot.slane %v163, 1
    %v165 = vadd.f32 %v163, %v164
    %s166 = vtos %v165
    %v167 = vrcp.pop 256.0
    %s168 = vtos %v167
    %s169 = smul.f32 %s166, %s168
    %v170 = vstv %s169
    %v171 = vsub.f32 %v153, %v170
    %v172 = vmul.f32 %v171, %v171
    %v173 = vsel %vm156, %v172, 0.0
    %174 = vadd.xlane.f32.xlu0 %v173
    %v175 = vpop.xlane.xlu0 %174
    %v176 = vrot.slane %v175, 4
    %v177 = vadd.f32 %v175, %v176
    %v178 = vrot.slane %v177, 2
    %v179 = vadd.f32 %v177, %v178
    %v180 = vrot.slane %v179, 1
    %v181 = vadd.f32 %v179, %v180
    %s182 = vtos %v181
    %v183 = vrcp.pop 256.0
    %s184 = vtos %v183
    %s185 = smul.f32 %s182, %s184
    %s186 = sadd.f32 %s185, 1e-05
    %v187 = vstv %s186
    %v188 = vrsqrt.pop %v187
    %s189 = vtos %v188
    %v190 = vstv %s189
    %v191 = vmul.f32 %v171, %v190
    %v192 = vstv %s154
    %v193 = vmul.f32 %v191, %v192
    %v194 = vstv %s155
    %v195 = vadd.f32 %v193, %v194
    %v196 = vpack.c.bf16 %v195, %v195
    %v197 = vld [vmem:[#allocation7] sm:$0xff]
    %s198 = sld [smem:[#allocation9 + $0x1]]
    %s199 = sld [smem:[#allocation10 + $0x1]]
    %v200 = vsel %vm156, %v197, 0.0
    %201 = vadd.xlane.f32.xlu0 %v200
    %v202 = vpop.xlane.xlu0 %201
    %v203 = vrot.slane %v202, 4
    %v204 = vadd.f32 %v202, %v203
    %v205 = vrot.slane %v204, 2
    %v206 = vadd.f32 %v204, %v205
    %v207 = vrot.slane %v206, 1
    %v208 = vadd.f32 %v206, %v207
    %s209 = vtos %v208
    %v210 = vrcp.pop 256.0
    %s211 = vtos %v210
    %s212 = smul.f32 %s209, %s211
    %v213 = vstv %s212
    %v214 = vsub.f32 %v197, %v213
    %v215 = vmul.f32 %v214, %v214
    %v216 = vsel %vm156, %v215, 0.0
    %217 = vadd.xlane.f32.xlu0 %v216
    %v218 = vpop.xlane.xlu0 %217
    %v219 = vrot.slane %v218, 4
    %v220 = vadd.f32 %v218, %v219
    %v221 = vrot.slane %v220, 2
    %v222 = vadd.f32 %v220, %v221
    %v223 = vrot.slane %v222, 1
    %v224 = vadd.f32 %v222, %v223
    %s225 = vtos %v224
    %v226 = vrcp.pop 256.0
    %s227 = vtos %v226
    %s228 = smul.f32 %s225, %s227
    %s229 = sadd.f32 %s228, 1e-05
    %v230 = vstv %s229
    %v231 = vrsqrt.pop %v230
    %s232 = vtos %v231
    %v233 = vstv %s232
    %v234 = vmul.f32 %v214, %v233
    %v235 = vstv %s198
    %v236 = vmul.f32 %v234, %v235
    %v237 = vstv %s199
    %v238 = vadd.f32 %v236, %v237
    %v239 = vpack.c.bf16 %v238, %v238
    %240 = vst.msk [vmem:[#allocation2] sm:$0xff] %vm156, 0.0
    loop: start=0, step=1, limit=8
    $region82: #{tpu_custom_call.1} parent=1 // loop_pre_header
      _
    $region83: #{tpu_custom_call.1} parent=1 // loop_header
      %s242 = sphi 0, %s246
      %p243 = scmp.ge.s32.totalorder %s242, 8
    $region84: #{tpu_custom_call.1} parent=1 // loop_header_branch
      %245 = sbr.rel (%p243) target = $region88
    $region85: #{tpu_custom_call.1} parent=1 // loop_body
      %s247 = smul.u32 %s242, 4
      %s248 = smul.addr %s247, 4
      %s249 = scalar_lea.vmem [#allocation15], %s248
      %v250 = vld [vmem:[%s249] sm:$0xf]
      %v251 = vld [vmem:[%s249 + $0x4] sm:$0xf]
      %v252 = vld [vmem:[%s249 + $0x8] sm:$0xf]
      %v253 = vld [vmem:[%s249 + $0xc] sm:$0xf]
      %s254 = smul.addr %s247, 4
      %s255 = scalar_lea.vmem [#allocation16], %s254
      %v256 = vld [vmem:[%s255] sm:$0xf]
      %v257 = vld [vmem:[%s255 + $0x4] sm:$0xf]
      %v258 = vld [vmem:[%s255 + $0x8] sm:$0xf]
      %v259 = vld [vmem:[%s255 + $0xc] sm:$0xf]
      %v264 = vunpack.c.l.b16 %v256
      %v265 = vunpack.c.l.b16 %v257
      %v266 = vunpack.c.l.b16 %v258
      %v267 = vunpack.c.l.b16 %v259
      %v268 = vpack.c.b16 %v265, %v264
      %v269 = vpack.c.b16 %v267, %v266
      %v273 = vsel %vm156, %v239, 0
      %275 = vmatprep.subr.bf16.mxu0 0
      %276 = vmatpush1.bf16.msra.mxu0 %v268
      %277 = vmatprep.subr.bf16.mxu0 0
      %278 = vmatpush1.bf16.msra.mxu0 %v269
      %279 = vmatprep.subr.bf16.mxu0 0
      %280 = vmatpush1.bf16.msra.mxu0 0
      %281 = vmatprep.subr.bf16.mxu0 0
      %282 = vmatpush1.bf16.msra.mxu0 0
      %283 = vmatprep.subr.bf16.mxu0 0
      %284 = vmatpush1.bf16.msra.mxu0 0
      %285 = vmatprep.subr.bf16.mxu0 0
      %286 = vmatpush1.bf16.msra.mxu0 0
      %287 = vmatprep.subr.bf16.mxu0 0
      %288 = vmatpush1.bf16.msra.mxu0 0
      %289 = vmatprep.subr.bf16.mxu0 0
      %290 = vmatpush1.bf16.msra.mxu0 0
      %291 = vmatprep.subr.bf16.mxu0 0
      %292 = vmatpush1.bf16.msra.mxu0 0
      %293 = vmatprep.subr.bf16.mxu0 0
      %294 = vmatpush1.bf16.msra.mxu0 0
      %295 = vmatprep.subr.bf16.mxu0 0
      %296 = vmatpush1.bf16.msra.mxu0 0
      %297 = vmatprep.subr.bf16.mxu0 0
      %298 = vmatpush1.bf16.msra.mxu0 0
      %299 = vmatprep.subr.bf16.mxu0 0
      %300 = vmatpush1.bf16.msra.mxu0 0
      %301 = vmatprep.subr.bf16.mxu0 0
      %302 = vmatpush1.bf16.msra.mxu0 0
      %303 = vmatprep.subr.bf16.mxu0 0
      %304 = vmatpush1.bf16.msra.mxu0 0
      %305 = vmatprep.subr.bf16.mxu0 0
      %306 = vmatpush1.bf16.msra.mxu0 0
      %307 = vmatprep.mubr.bf16.mxu0 0
      %308 = vmatmul.mubr.bf16.gmra.mrb[0].mxu0 %v273
      %v309 = vpop.f32.mrb[0].mxu0
      %v310 = vadd.f32 0.0, %v309
      %v311 = vpop.f32.mrb[0].mxu0
      %v312 = vpop.f32.mrb[0].mxu0
      %v313 = vpop.f32.mrb[0].mxu0
      %314 = vdwg.mxu0
      %v319 = vunpack.c.l.b16 %v250
      %v320 = vunpack.c.l.b16 %v251
      %v321 = vunpack.c.l.b16 %v252
      %v322 = vunpack.c.l.b16 %v253
      %v323 = vpack.c.b16 %v320, %v319
      %v324 = vpack.c.b16 %v322, %v321
      %v328 = vsel %vm156, %v196, 0
      %330 = vmatprep.subr.bf16.mxu0 0
      %331 = vmatpush1.bf16.msra.mxu0 %v323
      %332 = vmatprep.subr.bf16.mxu0 0
      %333 = vmatpush1.bf16.msra.mxu0 %v324
      %334 = vmatprep.subr.bf16.mxu0 0
      %335 = vmatpush1.bf16.msra.mxu0 0
      %336 = vmatprep.subr.bf16.mxu0 0
      %337 = vmatpush1.bf16.msra.mxu0 0
      %338 = vmatprep.subr.bf16.mxu0 0
      %339 = vmatpush1.bf16.msra.mxu0 0
      %340 = vmatprep.subr.bf16.mxu0 0
      %341 = vmatpush1.bf16.msra.mxu0 0
      %342 = vmatprep.subr.bf16.mxu0 0
      %343 = vmatpush1.bf16.msra.mxu0 0
      %344 = vmatprep.subr.bf16.mxu0 0
      %345 = vmatpush1.bf16.msra.mxu0 0
      %346 = vmatprep.subr.bf16.mxu0 0
      %347 = vmatpush1.bf16.msra.mxu0 0
      %348 = vmatprep.subr.bf16.mxu0 0
      %349 = vmatpush1.bf16.msra.mxu0 0
      %350 = vmatprep.subr.bf16.mxu0 0
      %351 = vmatpush1.bf16.msra.mxu0 0
      %352 = vmatprep.subr.bf16.mxu0 0
      %353 = vmatpush1.bf16.msra.mxu0 0
      %354 = vmatprep.subr.bf16.mxu0 0
      %355 = vmatpush1.bf16.msra.mxu0 0
      %356 = vmatprep.subr.bf16.mxu0 0
      %357 = vmatpush1.bf16.msra.mxu0 0
      %358 = vmatprep.subr.bf16.mxu0 0
      %359 = vmatpush1.bf16.msra.mxu0 0
      %360 = vmatprep.subr.bf16.mxu0 0
      %361 = vmatpush1.bf16.msra.mxu0 0
      %362 = vmatprep.mubr.bf16.mxu0 0
      %363 = vmatmul.mubr.bf16.gmra.mrb[0].mxu0 %v328
      %v364 = vpop.f32.mrb[0].mxu0
      %v365 = vadd.f32 %v310, %v364
      %v366 = vpop.f32.mrb[0].mxu0
      %v367 = vpop.f32.mrb[0].mxu0
      %v368 = vpop.f32.mrb[0].mxu0
      %369 = vdwg.mxu0
      %v370 = vsel %vm156, %v365, 0.0
      %371 = vadd.xlane.f32.xlu0 %v370
      %v372 = vpop.xlane.xlu0 %371
      %v373 = vrot.slane %v372, 4
      %v374 = vadd.f32 %v372, %v373
      %v375 = vrot.slane %v374, 2
      %v376 = vadd.f32 %v374, %v375
      %v377 = vrot.slane %v376, 1
      %v378 = vadd.f32 %v376, %v377
      %s379 = vtos %v378
      %v380 = vrcp.pop 256.0
      %s381 = vtos %v380
      %s382 = smul.f32 %s379, %s381
      %v383 = vstv %s382
      %v384 = vsub.f32 %v365, %v383
      %v385 = vmul.f32 %v384, %v384
      %v386 = vsel %vm156, %v385, 0.0
      %387 = vadd.xlane.f32.xlu0 %v386
      %v388 = vpop.xlane.xlu0 %387
      %v389 = vrot.slane %v388, 4
      %v390 = vadd.f32 %v388, %v389
      %v391 = vrot.slane %v390, 2
      %v392 = vadd.f32 %v390, %v391
      %v393 = vrot.slane %v392, 1
      %v394 = vadd.f32 %v392, %v393
      %s395 = vtos %v394
      %v396 = vrcp.pop 256.0
      %s397 = vtos %v396
      %s398 = smul.f32 %s395, %s397
      %s399 = sadd.f32 %s398, 1e-05
      %v400 = vstv %s399
      %v401 = vrsqrt.pop %v400
      %s402 = vtos %v401
      %v403 = vstv %s402
      %v404 = vmul.f32 %v384, %v403
      %s405 = sld [smem:[#allocation12 + %s242]]
      %v406 = vstv %s405
      %v407 = vmul.f32 %v404, %v406
      %s408 = sld [smem:[#allocation13 + %s242]]
      %v409 = vstv %s408
      %v410 = vadd.f32 %v407, %v409
      %v411 = vmax.f32 %v410, 0.0
      %v412 = vpack.c.bf16 %v411, %v411
      %v413 = vld [vmem:[#allocation2] sm:$0xff]
      %s414 = smul.addr %s247, 4
      %s415 = scalar_lea.vmem [#allocation18], %s414
      %v416 = vld [vmem:[%s415] sm:$0xf]
      %v417 = vld [vmem:[%s415 + $0x4] sm:$0xf]
      %v418 = vld [vmem:[%s415 + $0x8] sm:$0xf]
      %v419 = vld [vmem:[%s415 + $0xc] sm:$0xf]
      %v424 = vunpack.c.l.b16 %v416
      %v425 = vunpack.c.l.b16 %v417
      %v426 = vunpack.c.l.b16 %v418
      %v427 = vunpack.c.l.b16 %v419
      %v428 = vpack.c.b16 %v425, %v424
      %v429 = vpack.c.b16 %v427, %v426
      %v433 = vsel %vm156, %v412, 0
      %435 = vmatprep.subr.bf16.mxu0 0
      %436 = vmatpush1.bf16.msra.mxu0 %v428
      %437 = vmatprep.subr.bf16.mxu0 0
      %438 = vmatpush1.bf16.msra.mxu0 %v429
      %439 = vmatprep.subr.bf16.mxu0 0
      %440 = vmatpush1.bf16.msra.mxu0 0
      %441 = vmatprep.subr.bf16.mxu0 0
      %442 = vmatpush1.bf16.msra.mxu0 0
      %443 = vmatprep.subr.bf16.mxu0 0
      %444 = vmatpush1.bf16.msra.mxu0 0
      %445 = vmatprep.subr.bf16.mxu0 0
      %446 = vmatpush1.bf16.msra.mxu0 0
      %447 = vmatprep.subr.bf16.mxu0 0
      %448 = vmatpush1.bf16.msra.mxu0 0
      %449 = vmatprep.subr.bf16.mxu0 0
      %450 = vmatpush1.bf16.msra.mxu0 0
      %451 = vmatprep.subr.bf16.mxu0 0
      %452 = vmatpush1.bf16.msra.mxu0 0
      %453 = vmatprep.subr.bf16.mxu0 0
      %454 = vmatpush1.bf16.msra.mxu0 0
      %455 = vmatprep.subr.bf16.mxu0 0
      %456 = vmatpush1.bf16.msra.mxu0 0
      %457 = vmatprep.subr.bf16.mxu0 0
      %458 = vmatpush1.bf16.msra.mxu0 0
      %459 = vmatprep.subr.bf16.mxu0 0
      %460 = vmatpush1.bf16.msra.mxu0 0
      %461 = vmatprep.subr.bf16.mxu0 0
      %462 = vmatpush1.bf16.msra.mxu0 0
      %463 = vmatprep.subr.bf16.mxu0 0
      %464 = vmatpush1.bf16.msra.mxu0 0
      %465 = vmatprep.subr.bf16.mxu0 0
      %466 = vmatpush1.bf16.msra.mxu0 0
      %467 = vmatprep.mubr.bf16.mxu0 0
      %468 = vmatmul.mubr.bf16.gmra.mrb[0].mxu0 %v433
      %v469 = vpop.f32.mrb[0].mxu0
      %v470 = vadd.f32 0.0, %v469
      %v471 = vpop.f32.mrb[0].mxu0
      %v472 = vpop.f32.mrb[0].mxu0
      %v473 = vpop.f32.mrb[0].mxu0
      %474 = vdwg.mxu0
      %v475 = vadd.f32 %v413, %v470
      %476 = vst.msk [vmem:[#allocation2] sm:$0xff] %vm156, %v475
    $region86: #{tpu_custom_call.1} parent=1 // loop_footer
      %s246 = sadd.s32 1, %s242
    $region87: #{tpu_custom_call.1} parent=1 // loop_footer_branch
      %241 = sbr.rel target = $region83
    $region88: #{tpu_custom_call.1} parent=1 // loop_exit
      _
    %v477 = vld [vmem:[#allocation2] sm:$0xff]
    %v478 = vsel %vm156, %v477, 0.0
    %v479 = vrot.slane %v478, 4
    %v480 = vadd.f32 %v478, %v479
    %v481 = vrot.slane %v480, 2
    %v482 = vadd.f32 %v480, %v481
    %v483 = vrot.slane %v482, 1
    %v484 = vadd.f32 %v482, %v483
    %v485 = vrcp.pop 8.0
    %v486 = vmul.f32 %v484, %v485
    %v487 = vsub.f32 %v477, %v486
    %v488 = vmul.f32 %v487, %v487
    %v489 = vsel %vm156, %v488, 0.0
    %v490 = vrot.slane %v489, 4
    %v491 = vadd.f32 %v489, %v490
    %v492 = vrot.slane %v491, 2
    %v493 = vadd.f32 %v491, %v492
    %v494 = vrot.slane %v493, 1
    %v495 = vadd.f32 %v493, %v494
    %v496 = vmul.f32 %v495, %v485
    %v497 = vadd.f32 %v496, 1e-05
    %v498 = vrsqrt.pop %v497
    %v499 = vmul.f32 %v487, %v498
    %v500 = vld [vmem:[%s9] sm:$0x1]
    %v502 = vlaneseq
    %v503 = vshrl.u32 %v502, 7
    %v504 = vsub.s32 0, %v503
    %v505 = vrot.slane %v500, %v504
    %v507 = vmul.f32 %v499, %v505
    %v508 = vld [vmem:[%s10] sm:$0x1]
    %v510 = vlaneseq
    %v511 = vshrl.u32 %v510, 7
    %v512 = vsub.s32 0, %v511
    %v513 = vrot.slane %v508, %v512
    %v515 = vadd.f32 %v507, %v513
    %v516 = vmax.f32 %v515, 0.0
    %v517 = vpack.c.bf16 %v516, %v516
    %vm518 = vcmask 257024
    %519 = vst.msk [vmem:[#allocation19] sm:$0xf] %vm518, %v517
    // Predicated region
    $region89: #{tpu_custom_call.1} parent=1 // pred_check
      _
    $region90: #{tpu_custom_call.1} parent=1 // pred_check_branch
      %521 = sbr.rel (0) target = $region92
    $region91: #{tpu_custom_call.1} parent=1 // pred_region
      %s523 = ssub.s32 64, 64
      %524 = vsyncadd [#allocation5], %s523
      %s526 = sshll.u32 [#allocation19], 4
      %s527 = int_to_ptr.vmem [resolvable:$true] %s526
      %529 = dma.vmem_to_hbm [thread:$0]  %s527, 64, %s11, [#allocation5]
    $region92: #{tpu_custom_call.1} parent=1 // pred_fallthru
      _
    // Predicated region
    $region93: #{tpu_custom_call.1} parent=1 // pred_check
      _
    $region94: #{tpu_custom_call.1} parent=1 // pred_check_branch
      %531 = sbr.rel (0) target = $region96
    $region95: #{tpu_custom_call.1} parent=1 // pred_region
      %532 = dma.done [#allocation5], 64
    $region96: #{tpu_custom_call.1} parent=1 // pred_fallthru
      _
    %533 = vsyncpa [#allocation4], 1
    %534 = vsyncpa [#allocation8], 1
    %535 = vsyncpa [#allocation17], 1
    %536 = vsyncpa [#allocation5], 1
    %537 = vsyncpa [#allocation6], 1
    %538 = vsyncpa [#allocation11], 1
    %539 = vsyncpa [#allocation14], 1

</llo_original>
